<compile_context>
chip_gen: v7x
topology: tpu7x:2x2x1
jax: 0.10.0
libtpu: 0.0.40
codegen_flags: <defaults>
</compile_context>

<pallas_src>
import math

import jax
import jax.numpy as jnp
import numpy as np
from jax import lax
from jax.experimental import pallas as pl
from jax.experimental.pallas import tpu as pltpu


def _round_up(x, m):
    return (x + m - 1) // m * m


def _cdiv(a, b):
    return -(-a // b)


def clip_loss_kernel(scale_ref, img_ref, wi_ref, txtf_t_ref, out_ref, acc_ref):
    """grid=(num_i, num_k): K-accumulate the image projection in f32, then
    normalize, fold in logit_scale/100 and contract against the resident,
    pre-normalized bf16 text features (D_pad, Bt_pad)."""
    k = pl.program_id(1)

    # Image projection K step: (tb_i, tk)bf16 @ (tk, D_pad)bf16 -> f32.
    prod = jnp.dot(img_ref[...], wi_ref[...], preferred_element_type=jnp.float32)

    @pl.when(k == 0)
    def _first():
        acc_ref[...] = prod          # no zero-init + RMW on the first step

    @pl.when(k != 0)
    def _accum():
        acc_ref[...] += prod

    @pl.when(k == pl.num_programs(1) - 1)
    def _finalize():
        feat = acc_ref[...]
        inorm = jnp.sum(feat * feat, axis=-1, keepdims=True)
        # Fold logit_scale/100 into the per-row inverse norm (single scaling pass),
        # then drop to bf16 for the MXU similarity matmul.
        feat = (feat * (lax.rsqrt(jnp.maximum(inorm, 1e-12)) * scale_ref[0, 0])
                ).astype(jnp.bfloat16)
        logits = jnp.dot(feat, txtf_t_ref[...], preferred_element_type=jnp.float32)
        # CLIPLoss.forward: similarity = 1 - logit_scale * cos / 100
        out_ref[...] = 1.0 - logits


def _vmem_estimate(tb_i, tk, d_pad, bt_pad):
    """Conservative VMEM footprint (double-buffered inputs/outputs + scratch)."""
    img = 2 * tb_i * tk * 2          # bf16, double-buffered
    wi = 2 * tk * d_pad * 2          # bf16, double-buffered
    txt = 2 * d_pad * bt_pad * 2     # bf16 resident (count 2 bufs conservatively)
    out = 2 * tb_i * bt_pad * 4      # f32 output block
    acc = tb_i * d_pad * 4           # f32 accumulator scratch
    return img + wi + txt + out + acc


def _pick_tiles(B, F, d_pad, bt_pad, tb_req, tk_req, budget):
    """Derive (tb_i, tk, Bi_pad, F_pad) from the requested tile sizes, minimizing
    padding waste (ceil-split then round to 16 / 128) and fitting the VMEM budget.
    Shrink tk first, then tb_i (large tb_i is the bigger lever: it amortizes the
    w_img re-stream)."""
    tb_req = max(16, tb_req)
    tk_req = max(128, tk_req)
    while True:
        b_base = _round_up(B, 16)
        num_i = _cdiv(b_base, tb_req)
        tb_i = _round_up(_cdiv(b_base, num_i), 16)
        f_base = _round_up(F, 128)
        num_k = _cdiv(f_base, tk_req)
        tk = _round_up(_cdiv(f_base, num_k), 128)
        est = _vmem_estimate(tb_i, tk, d_pad, bt_pad)
        if est <= budget or (tb_req <= 256 and tk_req <= 512):
            return tb_i, tk, tb_i * num_i, tk * num_k, est
        if tk_req > 512:
            tk_req //= 2
        else:
            tb_req //= 2


def _pad2(x, rows, cols):
    pr, pc = rows - x.shape[0], cols - x.shape[1]
    if pr == 0 and pc == 0:
        return x
    return jnp.pad(x, ((0, pr), (0, pc)))


def clip_loss(image, text_tokens, params, *, tb_i=1024, tk=2048):
    """image: (B, C, H, W) f32; text_tokens: (B, L) int32 -> (B, B) f32."""
    B = image.shape[0]
    F = int(np.prod(image.shape[1:]))
    D = params["w_img"].shape[1]
    D_t = params["w_txt"].shape[0]

    # --- lane-dense padding of the small dims (real CLIP D=512 is already 256-aligned)
    D_pad = _round_up(D, 256) if D >= 256 else _round_up(D, 128)
    Bt_pad = _round_up(B, 256) if B >= 256 else _round_up(B, 128)

    # --- VMEM budget: derive from the chip (64 MiB on v7x, 128 MiB on v5e/v6e) ---
    try:
        vmem_cap = int(pltpu.get_tpu_info().vmem_capacity_bytes)
    except Exception:
        vmem_cap = 64 * 1024 * 1024
    budget = int(0.70 * vmem_cap)

    tb_i, tk, Bi_pad, F_pad, est = _pick_tiles(B, F, D_pad, Bt_pad, tb_i, tk, budget)
    num_i = Bi_pad // tb_i
    num_k = F_pad // tk
    vmem_limit = int(min(max(int(1.5 * est), 32 * 1024 * 1024), int(0.85 * vmem_cap)))

    # --- glue (plain JAX): flatten image, embed + mean-pool + project + normalize text ---
    img_flat = image.reshape(B, F).astype(jnp.float32)
    img_p = _pad2(img_flat.astype(jnp.bfloat16), Bi_pad, F_pad)
    wi_p = _pad2(params["w_img"].astype(jnp.bfloat16), F_pad, D_pad)

    tok_emb = jnp.take(params["tok_embed"], text_tokens, axis=0)           # (B, L, Dt)
    txt_pooled = jnp.mean(tok_emb, axis=1)                                 # (B, Dt) f32
    txt_feat = jnp.dot(txt_pooled.astype(jnp.bfloat16),
                       params["w_txt"].astype(jnp.bfloat16),
                       preferred_element_type=jnp.float32)                 # (B, D) f32
    tnorm = jnp.sum(txt_feat * txt_feat, axis=-1, keepdims=True)
    txt_feat = txt_feat * lax.rsqrt(jnp.maximum(tnorm, 1e-12))
    # Resident, pre-transposed, bf16 text features: (D_pad, Bt_pad).
    txtf_t = _pad2(txt_feat.T.astype(jnp.bfloat16), D_pad, Bt_pad)

    # logit_scale and the /100 folded into one scalar, delivered via SMEM.
    kscale = jnp.full((1, 1), params["logit_scale"] / 100.0, dtype=jnp.float32)

    out = pl.pallas_call(
        clip_loss_kernel,
        out_shape=jax.ShapeDtypeStruct((Bi_pad, Bt_pad), jnp.float32),
        grid=(num_i, num_k),
        in_specs=[
            pl.BlockSpec(memory_space=pltpu.MemorySpace.SMEM),        # kscale (1,1)
            pl.BlockSpec((tb_i, tk), lambda i, k: (i, k)),            # image slab
            pl.BlockSpec((tk, D_pad), lambda i, k: (k, 0)),           # w_img slab
            pl.BlockSpec((D_pad, Bt_pad), lambda i, k: (0, 0)),       # text feats (resident)
        ],
        out_specs=pl.BlockSpec((tb_i, Bt_pad), lambda i, k: (i, 0)),  # lane-dense out
        scratch_shapes=[
            pltpu.VMEM((tb_i, D_pad), jnp.float32),                   # image-proj accumulator
        ],
        compiler_params=pltpu.CompilerParams(
            dimension_semantics=("parallel", "arbitrary"),
            vmem_limit_bytes=vmem_limit,
        ),
    )(kscale, img_p, wi_p, txtf_t)

    return out[:B, :B]


def reference(image, text_tokens, params, matmul_dtype=jnp.float32):
    """Plain-JAX reference. matmul_dtype=bf16 mirrors the kernel's operand precision
    for the encoder matmuls (the final similarity stays f32 here)."""
    B = image.shape[0]
    img_flat = image.reshape(B, -1).astype(matmul_dtype)
    txt_pooled = jnp.mean(jnp.take(params["tok_embed"], text_tokens, axis=0),
                          axis=1).astype(matmul_dtype)
    img_feat = jnp.dot(img_flat, params["w_img"].astype(matmul_dtype),
                       preferred_element_type=jnp.float32)
    txt_feat = jnp.dot(txt_pooled, params["w_txt"].astype(matmul_dtype),
                       preferred_element_type=jnp.float32)
    img_feat = img_feat / jnp.linalg.norm(img_feat, axis=-1, keepdims=True)
    txt_feat = txt_feat / jnp.linalg.norm(txt_feat, axis=-1, keepdims=True)
    logits = params["logit_scale"] * (img_feat @ txt_feat.T)
    return 1.0 - logits / 100.0


if __name__ == "__main__":
    # Small shapes consistent with the forward: image NCHW, text token ids.
    B, C, H, W = 2, 3, 32, 32
    L, V, D_t, D = 8, 64, 32, 32

    key = jax.random.PRNGKey(0)
    k_img, k_txt, k_wi, k_wt, k_emb = jax.random.split(key, 5)

    image = jax.random.normal(k_img, (B, C, H, W), dtype=jnp.float32)
    text = jax.random.randint(k_txt, (B, L), 0, V, dtype=jnp.int32)

    # Deterministic synthetic parameters (shapes chosen by the encoder contract).
    params = {
        "w_img": 0.02 * jax.random.normal(k_wi, (C * H * W, D), dtype=jnp.float32),
        "w_txt": 0.02 * jax.random.normal(k_wt, (D_t, D), dtype=jnp.float32),
        "tok_embed": 0.02 * jax.random.normal(k_emb, (V, D_t), dtype=jnp.float32),
        # Trained CLIP has logit_scale.exp() ~= 100 (clamped).
        "logit_scale": 100.0,
    }

    # Check both scale=100 (cancels the /100) and scale!=100 (exercises scale handling).
    for scale in (100.0, 37.5):
        p = dict(params, logit_scale=scale)
        out = jax.block_until_ready(clip_loss(image, text, p))
        ref_bf16 = jax.block_until_ready(reference(image, text, p, jnp.bfloat16))
        ref_f32 = jax.block_until_ready(reference(image, text, p, jnp.float32))
        # Check vs a reference using the kernel's encoder operand precision
        # (slightly looser than before: the finalize matmul now runs in bf16).
        np.testing.assert_allclose(np.asarray(out), np.asarray(ref_bf16),
                                   rtol=1e-2, atol=1e-2)
        # Gating check vs the full-f32 (PyTorch-semantics) reference.
        np.testing.assert_allclose(np.asarray(out), np.asarray(ref_f32),
                                   rtol=2e-2, atol=2e-2)

    print("KERNEL_OK")
</pallas_src>

<mosaic_0001>
module attributes {stable_mosaic.version = 11 : i64} {
  func.func @clip_loss_kernel(%arg0: i32, %arg1: i32, %arg2: memref<1x1xf32, #tpu.memory_space<smem>>, %arg3: memref<16x1536xbf16, #tpu.memory_space<vmem>>, %arg4: memref<1536x128xbf16, #tpu.memory_space<vmem>>, %arg5: memref<128x128xbf16, #tpu.memory_space<vmem>>, %arg6: memref<16x128xf32, #tpu.memory_space<vmem>>, %arg7: memref<16x128xf32, #tpu.memory_space<vmem>>) attributes {dimension_semantics = [#tpu.dimension_semantics<parallel>, #tpu.dimension_semantics<arbitrary>], iteration_bounds = array<i64: 1, 2>, scalar_prefetch = 0 : i64, scratch_operands = 1 : i64, tpu.core_type = #tpu.core_type<tc>, window_params = [{transform_indices = @transform_0, window_bounds = array<i64: 1, 1>}, {transform_indices = @transform_1, window_bounds = array<i64: 16, 1536>}, {transform_indices = @transform_2, window_bounds = array<i64: 1536, 128>}, {pipeline_mode = #tpu.pipeline_mode<synchronous>, transform_indices = @transform_3, window_bounds = array<i64: 128, 128>}, {transform_indices = @transform_4, window_bounds = array<i64: 16, 128>}]} {
    %c0 = arith.constant 0 : index
    %c0_0 = arith.constant 0 : index
    %0 = vector.load %arg3[%c0, %c0_0] : memref<16x1536xbf16, #tpu.memory_space<vmem>>, vector<16x1536xbf16>
    %c0_1 = arith.constant 0 : index
    %c0_2 = arith.constant 0 : index
    %1 = vector.load %arg4[%c0_1, %c0_2] : memref<1536x128xbf16, #tpu.memory_space<vmem>>, vector<1536x128xbf16>
    %cst = arith.constant dense<0.000000e+00> : vector<16x128xf32>
    %2 = tpu.matmul %0, %1, %cst {dimension_numbers = #tpu.dot_dimension_numbers<[1], [0], [0], [1], [0, 0, 1, 1], [], []>} : vector<16x1536xbf16>, vector<1536x128xbf16>, vector<16x128xf32> -> vector<16x128xf32>
    %c0_i32 = arith.constant 0 : i32
    %3 = arith.cmpi eq, %arg1, %c0_i32 : i32
    %4 = arith.extui %3 : i1 to i32
    %c0_i32_3 = arith.constant 0 : i32
    %5 = arith.cmpi ne, %4, %c0_i32_3 : i32
    scf.if %5 {
      %c0_7 = arith.constant 0 : index
      %c0_8 = arith.constant 0 : index
      %12 = vector.load %arg7[%c0_7, %c0_8] : memref<16x128xf32, #tpu.memory_space<vmem>>, vector<16x128xf32>
      tpu.vector_store %arg7[%c0_7, %c0_8], %2 {strides = array<i32>} : memref<16x128xf32, #tpu.memory_space<vmem>>, vector<16x128xf32>,
    } else {
    }
    %c0_i32_4 = arith.constant 0 : i32
    %6 = arith.cmpi ne, %arg1, %c0_i32_4 : i32
    %7 = arith.extui %6 : i1 to i32
    %c0_i32_5 = arith.constant 0 : i32
    %8 = arith.cmpi ne, %7, %c0_i32_5 : i32
    scf.if %8 {
      %c0_7 = arith.constant 0 : index
      %c0_8 = arith.constant 0 : index
      %12 = vector.load %arg7[%c0_7, %c0_8] : memref<16x128xf32, #tpu.memory_space<vmem>>, vector<16x128xf32>
      %13 = arith.addf %12, %2 : vector<16x128xf32>
      %c0_9 = arith.constant 0 : index
      %c0_10 = arith.constant 0 : index
      %14 = vector.load %arg7[%c0_9, %c0_10] : memref<16x128xf32, #tpu.memory_space<vmem>>, vector<16x128xf32>
      tpu.vector_store %arg7[%c0_9, %c0_10], %13 {strides = array<i32>} : memref<16x128xf32, #tpu.memory_space<vmem>>, vector<16x128xf32>,
    } else {
    }
    %c1_i32 = arith.constant 1 : i32
    %9 = arith.cmpi eq, %arg1, %c1_i32 : i32
    %10 = arith.extui %9 : i1 to i32
    %c0_i32_6 = arith.constant 0 : i32
    %11 = arith.cmpi ne, %10, %c0_i32_6 : i32
    scf.if %11 {
      %c0_7 = arith.constant 0 : index
      %c0_8 = arith.constant 0 : index
      %12 = vector.load %arg7[%c0_7, %c0_8] : memref<16x128xf32, #tpu.memory_space<vmem>>, vector<16x128xf32>
      %13 = arith.mulf %12, %12 : vector<16x128xf32>
      %cst_9 = arith.constant dense<0.000000e+00> : vector<16xf32>
      %14 = vector.multi_reduction <add>, %13, %cst_9 [1] : vector<16x128xf32> to vector<16xf32>
      %15 = vector.shape_cast %14 : vector<16xf32> to vector<16x1xf32>
      %cst_10 = arith.constant 9.99999996E-13 : f32
      %16 = vector.broadcast %cst_10 : f32 to vector<16x1xf32>
      %17 = arith.maximumf %15, %16 : vector<16x1xf32>
      %18 = math.rsqrt %17 : vector<16x1xf32>
      %c0_11 = arith.constant 0 : index
      %c0_12 = arith.constant 0 : index
      %19 = memref.load %arg2[%c0_11, %c0_12] : memref<1x1xf32, #tpu.memory_space<smem>>
      %20 = vector.broadcast %19 : f32 to vector<16x1xf32>
      %21 = arith.mulf %18, %20 : vector<16x1xf32>
      %22 = vector.broadcast %21 : vector<16x1xf32> to vector<16x128xf32>
      %23 = arith.mulf %12, %22 : vector<16x128xf32>
      %24 = arith.truncf %23 : vector<16x128xf32> to vector<16x128xbf16>
      %c0_13 = arith.constant 0 : index
      %c0_14 = arith.constant 0 : index
      %25 = vector.load %arg5[%c0_13, %c0_14] : memref<128x128xbf16, #tpu.memory_space<vmem>>, vector<128x128xbf16>
      %cst_15 = arith.constant dense<0.000000e+00> : vector<16x128xf32>
      %26 = tpu.matmul %24, %25, %cst_15 {dimension_numbers = #tpu.dot_dimension_numbers<[1], [0], [0], [1], [0, 0, 1, 1], [], []>} : vector<16x128xbf16>, vector<128x128xbf16>, vector<16x128xf32> -> vector<16x128xf32>
      %cst_16 = arith.constant 1.000000e+00 : f32
      %27 = vector.broadcast %cst_16 : f32 to vector<16x128xf32>
      %28 = arith.subf %27, %26 : vector<16x128xf32>
      %c0_17 = arith.constant 0 : index
      %c0_18 = arith.constant 0 : index
      %29 = vector.load %arg6[%c0_17, %c0_18] : memref<16x128xf32, #tpu.memory_space<vmem>>, vector<16x128xf32>
      tpu.vector_store %arg6[%c0_17, %c0_18], %28 {strides = array<i32>} : memref<16x128xf32, #tpu.memory_space<vmem>>, vector<16x128xf32>,
    } else {
    }
    return
  }
  func.func @transform_0(%arg0: i32, %arg1: i32) -> (i32, i32) {
    %c0_i32 = arith.constant 0 : i32
    %c0_i32_0 = arith.constant 0 : i32
    %c0_i32_1 = arith.constant 0 : i32
    return %c0_i32, %c0_i32_0 : i32, i32
  }
  func.func @transform_1(%arg0: i32, %arg1: i32) -> (i32, i32) {
    %c0_i32 = arith.constant 0 : i32
    return %arg0, %arg1 : i32, i32
  }
  func.func @transform_2(%arg0: i32, %arg1: i32) -> (i32, i32) {
    %c0_i32 = arith.constant 0 : i32
    %c0_i32_0 = arith.constant 0 : i32
    return %arg1, %c0_i32 : i32, i32
  }
  func.func @transform_3(%arg0: i32, %arg1: i32) -> (i32, i32) {
    %c0_i32 = arith.constant 0 : i32
    %c0_i32_0 = arith.constant 0 : i32
    %c0_i32_1 = arith.constant 0 : i32
    return %c0_i32, %c0_i32_0 : i32, i32
  }
  func.func @transform_4(%arg0: i32, %arg1: i32) -> (i32, i32) {
    %c0_i32 = arith.constant 0 : i32
    %c0_i32_0 = arith.constant 0 : i32
    return %arg0, %c0_i32 : i32, i32
  }
}

</mosaic_0001>

<llo_original>
// kernel: tpu_custom_call.1
$region0: #{tpu_custom_call.1}
  #allocation0 [shape = 'u32[]', space=smem, size = 0x4, offset = 0x4, fixed_abs, tag = 'smem constant byte address 0x4 - core index']
  #allocation1 [shape = 'u32[144,128]{1,0:T(1,128)}', space=vmem, size = 0x12000, scoped, tag = 'internal scratch']
  #allocation2 [shape = 'f32[16,128]{1,0:T(8,128)}', space=vmem, size = 0x2000, scoped, tag = 'scratch operand']
  #allocation3 [shape = 'f32[1,1]{1,0:T(1,128)S(6)}', space=smem, size = 0x200, scoped, tag = 'scoped memory for tpu_custom_call.1']
  %s0 = inlined_call_operand.<no memory space> [shape: f32[1,1], index: 0, kind: input, shape index: {}]
  %s1 = inlined_call_operand.hbm [shape: bf16[16,3072], index: 1, kind: input, shape index: {}]
  %s2 = inlined_call_operand.hbm [shape: bf16[3072,128], index: 2, kind: input, shape index: {}]
  %s3 = inlined_call_operand.hbm [shape: bf16[128,128], index: 3, kind: input, shape index: {}]
  %s4 = inlined_call_operand.hbm [shape: f32[16,128], index: 4, kind: output, shape index: {}]
  %s5 = sld [smem:[#allocation0]]
  $region73: #{tpu_custom_call.1} parent=0
    _
  %s7 = ssub.s32 1, %s5
  %s8 = scalar_select 0, %s7, %s5
  %9 = sst [smem:[#allocation3]] %s0
  $region1: #{tpu_custom_call.1} parent=0
    #allocation4 [shape = 'u8[98304]{0}', space=vmem, size = 0x18000, scoped, tag = 'input window, operand 1']
    #allocation5 [shape = 's32[2]{0}', space=sflag, size = 0x8, scoped, tag = 'scoped memory for tpu_custom_call.1']
    #allocation6 [shape = 's32[2]{0}', space=sflag, size = 0x8, scoped, tag = 'scoped memory for tpu_custom_call.1']
    #allocation7 [shape = 'u8[786432]{0}', space=vmem, size = 0xc0000, scoped, tag = 'input window, operand 2']
    #allocation8 [shape = 's32[2]{0}', space=sflag, size = 0x8, scoped, tag = 'scoped memory for tpu_custom_call.1']
    #allocation9 [shape = 'u8[32768]{0}', space=vmem, size = 0x8000, scoped, tag = 'input window, operand 3, single buffered']
    #allocation10 [shape = 'u8[8192]{0}', space=vmem, size = 0x2000, scoped, tag = 'output window, operand 0, single buffered']
    %10 = vsyncpa [#allocation5], 0
    %s11 = scalar_lea.sflag [#allocation5], 1
    %12 = vsyncpa %s11, 0
    %13 = vsyncpa [#allocation8], 0
    %s14 = scalar_lea.sflag [#allocation8], 1
    %15 = vsyncpa %s14, 0
    %16 = vsyncpa [#allocation6], 0
    loop: start=0, step=1, limit=4
    $region2: #{tpu_custom_call.1} parent=1 // loop_pre_header
      _
    $region3: #{tpu_custom_call.1} parent=1 // loop_header
      %s18 = sphi 0, %s22
      %p19 = scmp.ge.s32.totalorder %s18, 4
      %s25 = sphi 0, %s37
      %s26 = sphi 0, %s33
      %s27 = sphi 0, %s25
      %s28 = sphi 0, %s26
      %s29 = sphi 0, %s27
      %s30 = sphi 0, %s28
      %s38 = sphi 0, %s38
      %s40 = sphi 0, %s38
      %s41 = sphi 0, %s40
      %s55 = sphi 0, %s41
      %s63 = sphi 0, %s65
      %s66 = sphi 0, %s63
      %s67 = sphi 0, %s66
      %s83 = sphi 0, %s67
      %s89 = sphi 0, %s91
      %s92 = sphi 0, %s89
      %s93 = sphi 0, %s92
      %s109 = sphi 0, %s93
      %s113 = sphi 0, %s113
      %s115 = sphi 0, %s113
      %s116 = sphi 0, %s115
      %s130 = sphi 0, %s116
      %s136 = sphi 0, %s138
      %s139 = sphi 0, %s136
      %s140 = sphi 0, %s139
      %s156 = sphi 0, %s140
    $region4: #{tpu_custom_call.1} parent=1 // loop_header_branch
      %21 = sbr.rel (%p19) target = $region8
    $region5: #{tpu_custom_call.1} parent=1 // loop_body
      %s23 = ssub.s32 %s18, 1
      %s24 = ssub.s32 %s18, 2
      %s31 = sadd.s32 1, %s26
      %p32 = scmp.ge.s32.totalorder %s31, 2
      %s33 = scalar_select %p32, 0, %s31
      %s34 = sadd.s32 1, %s25
      %s35 = scalar_select %p32, %s34, %s25
      %p36 = scmp.ge.s32.totalorder %s35, 1
      %s37 = scalar_select %p36, 0, %s35
      %s39 = sadd.s32 %s38, 1
      %p42 = scmp.eq.s32.totalorder %s18, 1
      %p43 = scmp.ne.s32.totalorder %s38, %s40
      %p44 = scmp.eq.s32.totalorder %s18, 0
      %p45 = por %p43, %p44
      %p46 = scmp.ne.s32.totalorder %s38, %s40
      %p47 = scmp.eq.s32.totalorder %s23, 1
      %p48 = por %p46, %p47
      %p49 = scmp.ne.s32.totalorder %s40, %s41
      %p50 = scmp.eq.s32.totalorder %s23, 0
      %p51 = por %p49, %p50
      %p52 = scmp.ne.s32.totalorder %s40, %s41
      %p53 = scmp.eq.s32.totalorder %s24, 1
      %p54 = por %p52, %p53
      %p56 = scmp.ne.s32.totalorder %s41, %s55
      %p57 = scmp.eq.s32.totalorder %s24, 0
      %p58 = por %p56, %p57
      %s59 = ssub.s32 %s25, %s37
      %s60 = ssub.s32 %s26, %s33
      %s61 = sor.u32 %s59, %s60
      %p62 = scmp.eq.s32.totalorder %s61, 0
      %s64 = sadd.s32 %s63, 1
      %s65 = scalar_select %p62, %s63, %s64
      %p68 = pneg %p62
      %p69 = scmp.eq.s32.totalorder %s18, 1
      %p70 = por %p68, %p69
      %p71 = scmp.ne.s32.totalorder %s63, %s66
      %p72 = scmp.eq.s32.totalorder %s18, 0
      %p73 = por %p71, %p72
      %p74 = scmp.ne.s32.totalorder %s63, %s66
      %p75 = scmp.eq.s32.totalorder %s23, 1
      %p76 = por %p74, %p75
      %p77 = scmp.ne.s32.totalorder %s66, %s67
      %p78 = scmp.eq.s32.totalorder %s23, 0
      %p79 = por %p77, %p78
      %p80 = scmp.ne.s32.totalorder %s66, %s67
      %p81 = scmp.eq.s32.totalorder %s24, 1
      %p82 = por %p80, %p81
      %p84 = scmp.ne.s32.totalorder %s67, %s83
      %p85 = scmp.eq.s32.totalorder %s24, 0
      %p86 = por %p84, %p85
      %s87 = ssub.s32 %s26, %s33
      %p88 = scmp.eq.s32.totalorder %s87, 0
      %s90 = sadd.s32 %s89, 1
      %s91 = scalar_select %p88, %s89, %s90
      %p94 = pneg %p88
      %p95 = scmp.eq.s32.totalorder %s18, 1
      %p96 = por %p94, %p95
      %p97 = scmp.ne.s32.totalorder %s89, %s92
      %p98 = scmp.eq.s32.totalorder %s18, 0
      %p99 = por %p97, %p98
      %p100 = scmp.ne.s32.totalorder %s89, %s92
      %p101 = scmp.eq.s32.totalorder %s23, 1
      %p102 = por %p100, %p101
      %p103 = scmp.ne.s32.totalorder %s92, %s93
      %p104 = scmp.eq.s32.totalorder %s23, 0
      %p105 = por %p103, %p104
      %p106 = scmp.ne.s32.totalorder %s92, %s93
      %p107 = scmp.eq.s32.totalorder %s24, 1
      %p108 = por %p106, %p107
      %p110 = scmp.ne.s32.totalorder %s93, %s109
      %p111 = scmp.eq.s32.totalorder %s24, 0
      %p112 = por %p110, %p111
      %s114 = sadd.s32 %s113, 1
      %p117 = scmp.eq.s32.totalorder %s18, 1
      %p118 = scmp.ne.s32.totalorder %s113, %s115
      %p119 = scmp.eq.s32.totalorder %s18, 0
      %p120 = por %p118, %p119
      %p121 = scmp.ne.s32.totalorder %s113, %s115
      %p122 = scmp.eq.s32.totalorder %s23, 1
      %p123 = por %p121, %p122
      %p124 = scmp.ne.s32.totalorder %s115, %s116
      %p125 = scmp.eq.s32.totalorder %s23, 0
      %p126 = por %p124, %p125
      %p127 = scmp.ne.s32.totalorder %s115, %s116
      %p128 = scmp.eq.s32.totalorder %s24, 1
      %p129 = por %p127, %p128
      %p131 = scmp.ne.s32.totalorder %s116, %s130
      %p132 = scmp.eq.s32.totalorder %s24, 0
      %p133 = por %p131, %p132
      %s134 = ssub.s32 %s25, %s37
      %p135 = scmp.eq.s32.totalorder %s134, 0
      %s137 = sadd.s32 %s136, 1
      %s138 = scalar_select %p135, %s136, %s137
      %p141 = pneg %p135
      %p142 = scmp.eq.s32.totalorder %s18, 1
      %p143 = por %p141, %p142
      %p144 = scmp.ne.s32.totalorder %s136, %s139
      %p145 = scmp.eq.s32.totalorder %s18, 0
      %p146 = por %p144, %p145
      %p147 = scmp.ne.s32.totalorder %s136, %s139
      %p148 = scmp.eq.s32.totalorder %s23, 1
      %p149 = por %p147, %p148
      %p150 = scmp.ne.s32.totalorder %s139, %s140
      %p151 = scmp.eq.s32.totalorder %s23, 0
      %p152 = por %p150, %p151
      %p153 = scmp.ne.s32.totalorder %s139, %s140
      %p154 = scmp.eq.s32.totalorder %s24, 1
      %p155 = por %p153, %p154
      %p157 = scmp.ne.s32.totalorder %s140, %s156
      %p158 = scmp.eq.s32.totalorder %s24, 0
      %p159 = por %p157, %p158
      %p160 = scmp.le.s32.totalorder 1, %s18
      %p161 = scmp.lt.s32.totalorder %s18, 3
      %p162 = pnand %p160, %p161
      %p163 = pneg %p162
      // Predicated region
      $region9: #{tpu_custom_call.1} parent=5 // pred_check
        _
      $region10: #{tpu_custom_call.1} parent=5 // pred_check_branch
        %165 = sbr.rel (%p162) target = $region12
      $region11: #{tpu_custom_call.1} parent=5 // pred_region
        %s166 = ssub.s32 %s18, 1
        // Predicated region
        $region13: #{tpu_custom_call.1} parent=11 // pred_check
          %p167 = pneg %p51
        $region14: #{tpu_custom_call.1} parent=11 // pred_check_branch
          %169 = sbr.rel (%p167) target = $region16
        $region15: #{tpu_custom_call.1} parent=11 // pred_region
          _
        $region16: #{tpu_custom_call.1} parent=11 // pred_fallthru
          _
        // Predicated region
        $region17: #{tpu_custom_call.1} parent=11 // pred_check
          %p170 = pneg %p126
        $region18: #{tpu_custom_call.1} parent=11 // pred_check_branch
          %172 = sbr.rel (%p170) target = $region20
        $region19: #{tpu_custom_call.1} parent=11 // pred_region
          %s174 = ssub.s32 1024, 1024
          %175 = vsyncadd [#allocation8], %s174
          %s176 = sshll.u32 [#allocation9], 4
          %s177 = int_to_ptr.vmem [resolvable:$true] %s176
          %182 = dma.hbm_to_vmem [thread:$0]  %s3, 1024, %s177, [#allocation8], 64, 64, 4
        $region20: #{tpu_custom_call.1} parent=11 // pred_fallthru
          _
      $region12: #{tpu_custom_call.1} parent=5 // pred_fallthru
        _
      %p183 = scmp.lt.s32.totalorder %s18, 2
      // Predicated region
      $region21: #{tpu_custom_call.1} parent=5 // pred_check
        %p184 = pneg %p183
      $region22: #{tpu_custom_call.1} parent=5 // pred_check_branch
        %186 = sbr.rel (%p184) target = $region24
      $region23: #{tpu_custom_call.1} parent=5 // pred_region
        // Predicated region
        $region25: #{tpu_custom_call.1} parent=23 // pred_check
          %p187 = pneg %p73
        $region26: #{tpu_custom_call.1} parent=23 // pred_check_branch
          %189 = sbr.rel (%p187) target = $region28
        $region27: #{tpu_custom_call.1} parent=23 // pred_region
          %s190 = sand.u32 %s63, 1
          %s191 = scalar_lea.sflag [#allocation5], %s190
          %s192 = sand.u32 %s63, 1
          %s193 = smul.addr %s192, 96
          %s194 = scalar_lea.vmem [#allocation4], %s193
          %s195 = smul.u32 2, %s25
          %s196 = smul.u32 12, %s26
          %s198 = ssub.s32 1536, 1536
          %199 = vsyncadd %s191, %s198
          %s200 = smul.addr %s195, 24
          %s201 = sadd.s32 %s196, %s200
          %s202 = smul.addr %s201, 64
          %s203 = scalar_lea.hbm %s1, %s202
          %s204 = sshll.u32 %s194, 4
          %s205 = int_to_ptr.vmem [resolvable:$true] %s204
          %210 = dma.hbm_to_vmem [thread:$0]  %s203, 1536, %s205, %s191, 1536, 768, 48
        $region28: #{tpu_custom_call.1} parent=23 // pred_fallthru
          _
        // Predicated region
        $region29: #{tpu_custom_call.1} parent=23 // pred_check
          %p211 = pneg %p99
        $region30: #{tpu_custom_call.1} parent=23 // pred_check_branch
          %213 = sbr.rel (%p211) target = $region32
        $region31: #{tpu_custom_call.1} parent=23 // pred_region
          %s214 = sand.u32 %s18, 1
          %s215 = scalar_lea.sflag [#allocation8], %s214
          %s216 = sand.u32 %s89, 1
          %s217 = smul.addr %s216, 768
          %s218 = scalar_lea.vmem [#allocation7], %s217
          %s219 = smul.u32 192, %s26
          %s221 = ssub.s32 12288, 12288
          %222 = vsyncadd %s215, %s221
          %s223 = smul.addr %s219, 64
          %s224 = scalar_lea.hbm %s2, %s223
          %s225 = sshll.u32 %s218, 4
          %s226 = int_to_ptr.vmem [resolvable:$true] %s225
          %231 = dma.hbm_to_vmem [thread:$0]  %s224, 12288, %s226, %s215, 64, 64, 4
        $region32: #{tpu_custom_call.1} parent=23 // pred_fallthru
          _
      $region24: #{tpu_custom_call.1} parent=5 // pred_fallthru
        _
      %p232 = scmp.le.s32.totalorder 1, %s18
      %p233 = scmp.lt.s32.totalorder %s18, 3
      %p234 = pnand %p232, %p233
      %p235 = pneg %p234
      // Predicated region
      $region33: #{tpu_custom_call.1} parent=5 // pred_check
        _
      $region34: #{tpu_custom_call.1} parent=5 // pred_check_branch
        %237 = sbr.rel (%p234) target = $region36
      $region35: #{tpu_custom_call.1} parent=5 // pred_region
        %s238 = ssub.s32 %s18, 1
        %s239 = sand.u32 %s66, 1
        %s240 = scalar_lea.sflag [#allocation5], %s239
        %s241 = sand.u32 %s66, 1
        %s242 = smul.addr %s241, 96
        %s243 = scalar_lea.vmem [#allocation4], %s242
        // Predicated region
        $region37: #{tpu_custom_call.1} parent=35 // pred_check
          %p244 = pneg %p79
        $region38: #{tpu_custom_call.1} parent=35 // pred_check_branch
          %246 = sbr.rel (%p244) target = $region40
        $region39: #{tpu_custom_call.1} parent=35 // pred_region
          %247 = dma.done %s240, 1536
        $region40: #{tpu_custom_call.1} parent=35 // pred_fallthru
          _
        %s248 = sand.u32 %s23, 1
        %s249 = scalar_lea.sflag [#allocation8], %s248
        %s250 = sand.u32 %s92, 1
        %s251 = smul.addr %s250, 768
        %s252 = scalar_lea.vmem [#allocation7], %s251
        // Predicated region
        $region41: #{tpu_custom_call.1} parent=35 // pred_check
          %p253 = pneg %p105
        $region42: #{tpu_custom_call.1} parent=35 // pred_check_branch
          %255 = sbr.rel (%p253) target = $region44
        $region43: #{tpu_custom_call.1} parent=35 // pred_region
          %256 = dma.done %s249, 12288
        $region44: #{tpu_custom_call.1} parent=35 // pred_fallthru
          _
        // Predicated region
        $region45: #{tpu_custom_call.1} parent=35 // pred_check
          %p257 = pneg %p126
        $region46: #{tpu_custom_call.1} parent=35 // pred_check_branch
          %259 = sbr.rel (%p257) target = $region48
        $region47: #{tpu_custom_call.1} parent=35 // pred_region
          %260 = dma.done [#allocation8], 1024
        $region48: #{tpu_custom_call.1} parent=35 // pred_fallthru
          _
        %p261 = pneg %p51
        %p262 = pneg %p48
        %s263 = sand.u32 %s66, 1
        %s264 = scalar_lea.sflag [#allocation5], %s263
        %s265 = sand.u32 %s66, 1
        %s266 = smul.addr %s265, 96
        %s267 = scalar_lea.vmem [#allocation4], %s266
        %p268 = pneg %p79
        %p269 = pneg %p76
        %s270 = sand.u32 %s23, 1
        %s271 = scalar_lea.sflag [#allocation8], %s270
        %s272 = sand.u32 %s92, 1
        %s273 = smul.addr %s272, 768
        %s274 = scalar_lea.vmem [#allocation7], %s273
        %p275 = pneg %p105
        %p276 = pneg %p102
        %p277 = pneg %p126
        %p278 = pneg %p123
        %p279 = pneg %p152
        %p280 = pneg %p149
        %s281 = smul.u32 2, %s27
        %s282 = smul.u32 12, %s28
        %s283 = smul.u32 192, %s28
        %s284 = smul.u32 2, %s27
        %v286 = vld [vmem:[%s243] sm:$0xff]
        %v287 = vld [vmem:[%s243 + $0x8] sm:$0xff]
        %v288 = vld [vmem:[%s243 + $0x10] sm:$0xff]
        %v289 = vld [vmem:[%s243 + $0x18] sm:$0xff]
        %v290 = vld [vmem:[%s243 + $0x20] sm:$0xff]
        %v291 = vld [vmem:[%s243 + $0x28] sm:$0xff]
        %v292 = vld [vmem:[%s243 + $0x30] sm:$0xff]
        %v293 = vld [vmem:[%s243 + $0x38] sm:$0xff]
        %v294 = vld [vmem:[%s243 + $0x40] sm:$0xff]
        %v295 = vld [vmem:[%s243 + $0x48] sm:$0xff]
        %v296 = vld [vmem:[%s243 + $0x50] sm:$0xff]
        %v297 = vld [vmem:[%s243 + $0x58] sm:$0xff]
        %v298 = vld [vmem:[%s252] sm:$0xf]
        %v299 = vld [vmem:[%s252 + $0x4] sm:$0xf]
        %v300 = vld [vmem:[%s252 + $0x8] sm:$0xf]
        %v301 = vld [vmem:[%s252 + $0xc] sm:$0xf]
        %v302 = vld [vmem:[%s252 + $0x10] sm:$0xf]
        %v303 = vld [vmem:[%s252 + $0x14] sm:$0xf]
        %v304 = vld [vmem:[%s252 + $0x18] sm:$0xf]
        %v305 = vld [vmem:[%s252 + $0x1c] sm:$0xf]
        %v306 = vld [vmem:[%s252 + $0x20] sm:$0xf]
        %v307 = vld [vmem:[%s252 + $0x24] sm:$0xf]
        %v308 = vld [vmem:[%s252 + $0x28] sm:$0xf]
        %v309 = vld [vmem:[%s252 + $0x2c] sm:$0xf]
        %v310 = vld [vmem:[%s252 + $0x30] sm:$0xf]
        %v311 = vld [vmem:[%s252 + $0x34] sm:$0xf]
        %v312 = vld [vmem:[%s252 + $0x38] sm:$0xf]
        %v313 = vld [vmem:[%s252 + $0x3c] sm:$0xf]
        %v314 = vld [vmem:[%s252 + $0x40] sm:$0xf]
        %v315 = vld [vmem:[%s252 + $0x44] sm:$0xf]
        %v316 = vld [vmem:[%s252 + $0x48] sm:$0xf]
        %v317 = vld [vmem:[%s252 + $0x4c] sm:$0xf]
        %v318 = vld [vmem:[%s252 + $0x50] sm:$0xf]
        %v319 = vld [vmem:[%s252 + $0x54] sm:$0xf]
        %v320 = vld [vmem:[%s252 + $0x58] sm:$0xf]
        %v321 = vld [vmem:[%s252 + $0x5c] sm:$0xf]
        %v322 = vld [vmem:[%s252 + $0x60] sm:$0xf]
        %v323 = vld [vmem:[%s252 + $0x64] sm:$0xf]
        %v324 = vld [vmem:[%s252 + $0x68] sm:$0xf]
        %v325 = vld [vmem:[%s252 + $0x6c] sm:$0xf]
        %v326 = vld [vmem:[%s252 + $0x70] sm:$0xf]
        %v327 = vld [vmem:[%s252 + $0x74] sm:$0xf]
        %v328 = vld [vmem:[%s252 + $0x78] sm:$0xf]
        %v329 = vld [vmem:[%s252 + $0x7c] sm:$0xf]
        %v330 = vld [vmem:[%s252 + $0x80] sm:$0xf]
        %v331 = vld [vmem:[%s252 + $0x84] sm:$0xf]
        %v332 = vld [vmem:[%s252 + $0x88] sm:$0xf]
        %v333 = vld [vmem:[%s252 + $0x8c] sm:$0xf]
        %v334 = vld [vmem:[%s252 + $0x90] sm:$0xf]
        %v335 = vld [vmem:[%s252 + $0x94] sm:$0xf]
        %v336 = vld [vmem:[%s252 + $0x98] sm:$0xf]
        %v337 = vld [vmem:[%s252 + $0x9c] sm:$0xf]
        %v338 = vld [vmem:[%s252 + $0xa0] sm:$0xf]
        %v339 = vld [vmem:[%s252 + $0xa4] sm:$0xf]
        %v340 = vld [vmem:[%s252 + $0xa8] sm:$0xf]
        %v341 = vld [vmem:[%s252 + $0xac] sm:$0xf]
        %v342 = vld [vmem:[%s252 + $0xb0] sm:$0xf]
        %v343 = vld [vmem:[%s252 + $0xb4] sm:$0xf]
        %v344 = vld [vmem:[%s252 + $0xb8] sm:$0xf]
        %v345 = vld [vmem:[%s252 + $0xbc] sm:$0xf]
        %v346 = vld [vmem:[%s252 + $0xc0] sm:$0xf]
        %v347 = vld [vmem:[%s252 + $0xc4] sm:$0xf]
        %v348 = vld [vmem:[%s252 + $0xc8] sm:$0xf]
        %v349 = vld [vmem:[%s252 + $0xcc] sm:$0xf]
        %v350 = vld [vmem:[%s252 + $0xd0] sm:$0xf]
        %v351 = vld [vmem:[%s252 + $0xd4] sm:$0xf]
        %v352 = vld [vmem:[%s252 + $0xd8] sm:$0xf]
        %v353 = vld [vmem:[%s252 + $0xdc] sm:$0xf]
        %v354 = vld [vmem:[%s252 + $0xe0] sm:$0xf]
        %v355 = vld [vmem:[%s252 + $0xe4] sm:$0xf]
        %v356 = vld [vmem:[%s252 + $0xe8] sm:$0xf]
        %v357 = vld [vmem:[%s252 + $0xec] sm:$0xf]
        %v358 = vld [vmem:[%s252 + $0xf0] sm:$0xf]
        %v359 = vld [vmem:[%s252 + $0xf4] sm:$0xf]
        %v360 = vld [vmem:[%s252 + $0xf8] sm:$0xf]
        %v361 = vld [vmem:[%s252 + $0xfc] sm:$0xf]
        %v362 = vld [vmem:[%s252 + $0x100] sm:$0xf]
        %v363 = vld [vmem:[%s252 + $0x104] sm:$0xf]
        %v364 = vld [vmem:[%s252 + $0x108] sm:$0xf]
        %v365 = vld [vmem:[%s252 + $0x10c] sm:$0xf]
        %v366 = vld [vmem:[%s252 + $0x110] sm:$0xf]
        %v367 = vld [vmem:[%s252 + $0x114] sm:$0xf]
        %v368 = vld [vmem:[%s252 + $0x118] sm:$0xf]
        %v369 = vld [vmem:[%s252 + $0x11c] sm:$0xf]
        %v370 = vld [vmem:[%s252 + $0x120] sm:$0xf]
        %v371 = vld [vmem:[%s252 + $0x124] sm:$0xf]
        %v372 = vld [vmem:[%s252 + $0x128] sm:$0xf]
        %v373 = vld [vmem:[%s252 + $0x12c] sm:$0xf]
        %v374 = vld [vmem:[%s252 + $0x130] sm:$0xf]
        %v375 = vld [vmem:[%s252 + $0x134] sm:$0xf]
        %v376 = vld [vmem:[%s252 + $0x138] sm:$0xf]
        %v377 = vld [vmem:[%s252 + $0x13c] sm:$0xf]
        %v378 = vld [vmem:[%s252 + $0x140] sm:$0xf]
        %v379 = vld [vmem:[%s252 + $0x144] sm:$0xf]
        %v380 = vld [vmem:[%s252 + $0x148] sm:$0xf]
        %v381 = vld [vmem:[%s252 + $0x14c] sm:$0xf]
        %v382 = vld [vmem:[%s252 + $0x150] sm:$0xf]
        %v383 = vld [vmem:[%s252 + $0x154] sm:$0xf]
        %v384 = vld [vmem:[%s252 + $0x158] sm:$0xf]
        %v385 = vld [vmem:[%s252 + $0x15c] sm:$0xf]
        %v386 = vld [vmem:[%s252 + $0x160] sm:$0xf]
        %v387 = vld [vmem:[%s252 + $0x164] sm:$0xf]
        %v388 = vld [vmem:[%s252 + $0x168] sm:$0xf]
        %v389 = vld [vmem:[%s252 + $0x16c] sm:$0xf]
        %v390 = vld [vmem:[%s252 + $0x170] sm:$0xf]
        %v391 = vld [vmem:[%s252 + $0x174] sm:$0xf]
        %v392 = vld [vmem:[%s252 + $0x178] sm:$0xf]
        %v393 = vld [vmem:[%s252 + $0x17c] sm:$0xf]
        %v394 = vld [vmem:[%s252 + $0x180] sm:$0xf]
        %v395 = vld [vmem:[%s252 + $0x184] sm:$0xf]
        %v396 = vld [vmem:[%s252 + $0x188] sm:$0xf]
        %v397 = vld [vmem:[%s252 + $0x18c] sm:$0xf]
        %v398 = vld [vmem:[%s252 + $0x190] sm:$0xf]
        %v399 = vld [vmem:[%s252 + $0x194] sm:$0xf]
        %v400 = vld [vmem:[%s252 + $0x198] sm:$0xf]
        %v401 = vld [vmem:[%s252 + $0x19c] sm:$0xf]
        %v402 = vld [vmem:[%s252 + $0x1a0] sm:$0xf]
        %v403 = vld [vmem:[%s252 + $0x1a4] sm:$0xf]
        %v404 = vld [vmem:[%s252 + $0x1a8] sm:$0xf]
        %v405 = vld [vmem:[%s252 + $0x1ac] sm:$0xf]
        %v406 = vld [vmem:[%s252 + $0x1b0] sm:$0xf]
        %v407 = vld [vmem:[%s252 + $0x1b4] sm:$0xf]
        %v408 = vld [vmem:[%s252 + $0x1b8] sm:$0xf]
        %v409 = vld [vmem:[%s252 + $0x1bc] sm:$0xf]
        %v410 = vld [vmem:[%s252 + $0x1c0] sm:$0xf]
        %v411 = vld [vmem:[%s252 + $0x1c4] sm:$0xf]
        %v412 = vld [vmem:[%s252 + $0x1c8] sm:$0xf]
        %v413 = vld [vmem:[%s252 + $0x1cc] sm:$0xf]
        %v414 = vld [vmem:[%s252 + $0x1d0] sm:$0xf]
        %v415 = vld [vmem:[%s252 + $0x1d4] sm:$0xf]
        %v416 = vld [vmem:[%s252 + $0x1d8] sm:$0xf]
        %v417 = vld [vmem:[%s252 + $0x1dc] sm:$0xf]
        %v418 = vld [vmem:[%s252 + $0x1e0] sm:$0xf]
        %v419 = vld [vmem:[%s252 + $0x1e4] sm:$0xf]
        %v420 = vld [vmem:[%s252 + $0x1e8] sm:$0xf]
        %v421 = vld [vmem:[%s252 + $0x1ec] sm:$0xf]
        %v422 = vld [vmem:[%s252 + $0x1f0] sm:$0xf]
        %v423 = vld [vmem:[%s252 + $0x1f4] sm:$0xf]
        %v424 = vld [vmem:[%s252 + $0x1f8] sm:$0xf]
        %v425 = vld [vmem:[%s252 + $0x1fc] sm:$0xf]
        %v426 = vld [vmem:[%s252 + $0x200] sm:$0xf]
        %v427 = vld [vmem:[%s252 + $0x204] sm:$0xf]
        %v428 = vld [vmem:[%s252 + $0x208] sm:$0xf]
        %v429 = vld [vmem:[%s252 + $0x20c] sm:$0xf]
        %v430 = vld [vmem:[%s252 + $0x210] sm:$0xf]
        %v431 = vld [vmem:[%s252 + $0x214] sm:$0xf]
        %v432 = vld [vmem:[%s252 + $0x218] sm:$0xf]
        %v433 = vld [vmem:[%s252 + $0x21c] sm:$0xf]
        %v434 = vld [vmem:[%s252 + $0x220] sm:$0xf]
        %v435 = vld [vmem:[%s252 + $0x224] sm:$0xf]
        %v436 = vld [vmem:[%s252 + $0x228] sm:$0xf]
        %v437 = vld [vmem:[%s252 + $0x22c] sm:$0xf]
        %v438 = vld [vmem:[%s252 + $0x230] sm:$0xf]
        %v439 = vld [vmem:[%s252 + $0x234] sm:$0xf]
        %v440 = vld [vmem:[%s252 + $0x238] sm:$0xf]
        %v441 = vld [vmem:[%s252 + $0x23c] sm:$0xf]
        %v442 = vld [vmem:[%s252 + $0x240] sm:$0xf]
        %v443 = vld [vmem:[%s252 + $0x244] sm:$0xf]
        %v444 = vld [vmem:[%s252 + $0x248] sm:$0xf]
        %v445 = vld [vmem:[%s252 + $0x24c] sm:$0xf]
        %v446 = vld [vmem:[%s252 + $0x250] sm:$0xf]
        %v447 = vld [vmem:[%s252 + $0x254] sm:$0xf]
        %v448 = vld [vmem:[%s252 + $0x258] sm:$0xf]
        %v449 = vld [vmem:[%s252 + $0x25c] sm:$0xf]
        %v450 = vld [vmem:[%s252 + $0x260] sm:$0xf]
        %v451 = vld [vmem:[%s252 + $0x264] sm:$0xf]
        %v452 = vld [vmem:[%s252 + $0x268] sm:$0xf]
        %v453 = vld [vmem:[%s252 + $0x26c] sm:$0xf]
        %v454 = vld [vmem:[%s252 + $0x270] sm:$0xf]
        %v455 = vld [vmem:[%s252 + $0x274] sm:$0xf]
        %v456 = vld [vmem:[%s252 + $0x278] sm:$0xf]
        %v457 = vld [vmem:[%s252 + $0x27c] sm:$0xf]
        %v458 = vld [vmem:[%s252 + $0x280] sm:$0xf]
        %v459 = vld [vmem:[%s252 + $0x284] sm:$0xf]
        %v460 = vld [vmem:[%s252 + $0x288] sm:$0xf]
        %v461 = vld [vmem:[%s252 + $0x28c] sm:$0xf]
        %v462 = vld [vmem:[%s252 + $0x290] sm:$0xf]
        %v463 = vld [vmem:[%s252 + $0x294] sm:$0xf]
        %v464 = vld [vmem:[%s252 + $0x298] sm:$0xf]
        %v465 = vld [vmem:[%s252 + $0x29c] sm:$0xf]
        %v466 = vld [vmem:[%s252 + $0x2a0] sm:$0xf]
        %v467 = vld [vmem:[%s252 + $0x2a4] sm:$0xf]
        %v468 = vld [vmem:[%s252 + $0x2a8] sm:$0xf]
        %v469 = vld [vmem:[%s252 + $0x2ac] sm:$0xf]
        %v470 = vld [vmem:[%s252 + $0x2b0] sm:$0xf]
        %v471 = vld [vmem:[%s252 + $0x2b4] sm:$0xf]
        %v472 = vld [vmem:[%s252 + $0x2b8] sm:$0xf]
        %v473 = vld [vmem:[%s252 + $0x2bc] sm:$0xf]
        %v474 = vld [vmem:[%s252 + $0x2c0] sm:$0xf]
        %v475 = vld [vmem:[%s252 + $0x2c4] sm:$0xf]
        %v476 = vld [vmem:[%s252 + $0x2c8] sm:$0xf]
        %v477 = vld [vmem:[%s252 + $0x2cc] sm:$0xf]
        %v478 = vld [vmem:[%s252 + $0x2d0] sm:$0xf]
        %v479 = vld [vmem:[%s252 + $0x2d4] sm:$0xf]
        %v480 = vld [vmem:[%s252 + $0x2d8] sm:$0xf]
        %v481 = vld [vmem:[%s252 + $0x2dc] sm:$0xf]
        %v482 = vld [vmem:[%s252 + $0x2e0] sm:$0xf]
        %v483 = vld [vmem:[%s252 + $0x2e4] sm:$0xf]
        %v484 = vld [vmem:[%s252 + $0x2e8] sm:$0xf]
        %v485 = vld [vmem:[%s252 + $0x2ec] sm:$0xf]
        %v486 = vld [vmem:[%s252 + $0x2f0] sm:$0xf]
        %v487 = vld [vmem:[%s252 + $0x2f4] sm:$0xf]
        %v488 = vld [vmem:[%s252 + $0x2f8] sm:$0xf]
        %v489 = vld [vmem:[%s252 + $0x2fc] sm:$0xf]
        %v502 = vunpack.c.l.b16 %v286
        %v503 = vunpack.c.h.b16 %v286
        %v504 = vunpack.c.l.b16 %v287
        %v505 = vunpack.c.h.b16 %v287
        %v506 = vunpack.c.l.b16 %v288
        %v507 = vunpack.c.h.b16 %v288
        %v508 = vunpack.c.l.b16 %v289
        %v509 = vunpack.c.h.b16 %v289
        %v510 = vunpack.c.l.b16 %v290
        %v511 = vunpack.c.h.b16 %v290
        %v512 = vunpack.c.l.b16 %v291
        %v513 = vunpack.c.h.b16 %v291
        %v514 = vunpack.c.l.b16 %v292
        %v515 = vunpack.c.h.b16 %v292
        %v516 = vunpack.c.l.b16 %v293
        %v517 = vunpack.c.h.b16 %v293
        %v518 = vunpack.c.l.b16 %v294
        %v519 = vunpack.c.h.b16 %v294
        %v520 = vunpack.c.l.b16 %v295
        %v521 = vunpack.c.h.b16 %v295
        %v522 = vunpack.c.l.b16 %v296
        %v523 = vunpack.c.h.b16 %v296
        %v524 = vunpack.c.l.b16 %v297
        %v525 = vunpack.c.h.b16 %v297
        %v526 = vpack.c.b16 %v514, %v502
        %v527 = vpack.c.b16 %v515, %v503
        %v528 = vpack.c.b16 %v516, %v504
        %v529 = vpack.c.b16 %v517, %v505
        %v530 = vpack.c.b16 %v518, %v506
        %v531 = vpack.c.b16 %v519, %v507
        %v532 = vpack.c.b16 %v520, %v508
        %v533 = vpack.c.b16 %v521, %v509
        %v534 = vpack.c.b16 %v522, %v510
        %v535 = vpack.c.b16 %v523, %v511
        %v536 = vpack.c.b16 %v524, %v512
        %v537 = vpack.c.b16 %v525, %v513
        %v742 = vunpack.c.l.b16 %v298
        %v743 = vunpack.c.l.b16 %v299
        %v744 = vunpack.c.l.b16 %v300
        %v745 = vunpack.c.l.b16 %v301
        %v746 = vunpack.c.l.b16 %v302
        %v747 = vunpack.c.l.b16 %v303
        %v748 = vunpack.c.l.b16 %v304
        %v749 = vunpack.c.l.b16 %v305
        %v750 = vunpack.c.l.b16 %v306
        %v751 = vunpack.c.l.b16 %v307
        %v752 = vunpack.c.l.b16 %v308
        %v753 = vunpack.c.l.b16 %v309
        %v754 = vunpack.c.l.b16 %v310
        %v755 = vunpack.c.l.b16 %v311
        %v756 = vunpack.c.l.b16 %v312
        %v757 = vunpack.c.l.b16 %v313
        %v758 = vunpack.c.l.b16 %v314
        %v759 = vunpack.c.l.b16 %v315
        %v760 = vunpack.c.l.b16 %v316
        %v761 = vunpack.c.l.b16 %v317
        %v762 = vunpack.c.l.b16 %v318
        %v763 = vunpack.c.l.b16 %v319
        %v764 = vunpack.c.l.b16 %v320
        %v765 = vunpack.c.l.b16 %v321
        %v766 = vunpack.c.l.b16 %v322
        %v767 = vunpack.c.l.b16 %v323
        %v768 = vunpack.c.l.b16 %v324
        %v769 = vunpack.c.l.b16 %v325
        %v770 = vunpack.c.l.b16 %v326
        %v771 = vunpack.c.l.b16 %v327
        %v772 = vunpack.c.l.b16 %v328
        %v773 = vunpack.c.l.b16 %v329
        %v774 = vunpack.c.l.b16 %v330
        %v775 = vunpack.c.l.b16 %v331
        %v776 = vunpack.c.l.b16 %v332
        %v777 = vunpack.c.l.b16 %v333
        %v778 = vunpack.c.l.b16 %v334
        %v779 = vunpack.c.l.b16 %v335
        %v780 = vunpack.c.l.b16 %v336
        %v781 = vunpack.c.l.b16 %v337
        %v782 = vunpack.c.l.b16 %v338
        %v783 = vunpack.c.l.b16 %v339
        %v784 = vunpack.c.l.b16 %v340
        %v785 = vunpack.c.l.b16 %v341
        %v786 = vunpack.c.l.b16 %v342
        %v787 = vunpack.c.l.b16 %v343
        %v788 = vunpack.c.l.b16 %v344
        %v789 = vunpack.c.l.b16 %v345
        %v790 = vunpack.c.l.b16 %v346
        %v791 = vunpack.c.l.b16 %v347
        %v792 = vunpack.c.l.b16 %v348
        %v793 = vunpack.c.l.b16 %v349
        %v794 = vunpack.c.l.b16 %v350
        %v795 = vunpack.c.l.b16 %v351
        %v796 = vunpack.c.l.b16 %v352
        %v797 = vunpack.c.l.b16 %v353
        %v798 = vunpack.c.l.b16 %v354
        %v799 = vunpack.c.l.b16 %v355
        %v800 = vunpack.c.l.b16 %v356
        %v801 = vunpack.c.l.b16 %v357
        %v802 = vunpack.c.l.b16 %v358
        %v803 = vunpack.c.l.b16 %v359
        %v804 = vunpack.c.l.b16 %v360
        %v805 = vunpack.c.l.b16 %v361
        %v806 = vunpack.c.l.b16 %v362
        %v807 = vunpack.c.l.b16 %v363
        %v808 = vunpack.c.l.b16 %v364
        %v809 = vunpack.c.l.b16 %v365
        %v810 = vunpack.c.l.b16 %v366
        %v811 = vunpack.c.l.b16 %v367
        %v812 = vunpack.c.l.b16 %v368
        %v813 = vunpack.c.l.b16 %v369
        %v814 = vunpack.c.l.b16 %v370
        %v815 = vunpack.c.l.b16 %v371
        %v816 = vunpack.c.l.b16 %v372
        %v817 = vunpack.c.l.b16 %v373
        %v818 = vunpack.c.l.b16 %v374
        %v819 = vunpack.c.l.b16 %v375
        %v820 = vunpack.c.l.b16 %v376
        %v821 = vunpack.c.l.b16 %v377
        %v822 = vunpack.c.l.b16 %v378
        %v823 = vunpack.c.l.b16 %v379
        %v824 = vunpack.c.l.b16 %v380
        %v825 = vunpack.c.l.b16 %v381
        %v826 = vunpack.c.l.b16 %v382
        %v827 = vunpack.c.l.b16 %v383
        %v828 = vunpack.c.l.b16 %v384
        %v829 = vunpack.c.l.b16 %v385
        %v830 = vunpack.c.l.b16 %v386
        %v831 = vunpack.c.l.b16 %v387
        %v832 = vunpack.c.l.b16 %v388
        %v833 = vunpack.c.l.b16 %v389
        %v834 = vunpack.c.l.b16 %v390
        %v835 = vunpack.c.l.b16 %v391
        %v836 = vunpack.c.l.b16 %v392
        %v837 = vunpack.c.l.b16 %v393
        %v838 = vunpack.c.l.b16 %v394
        %v839 = vunpack.c.l.b16 %v395
        %v840 = vunpack.c.l.b16 %v396
        %v841 = vunpack.c.l.b16 %v397
        %v842 = vunpack.c.l.b16 %v398
        %v843 = vunpack.c.l.b16 %v399
        %v844 = vunpack.c.l.b16 %v400
        %v845 = vunpack.c.l.b16 %v401
        %v846 = vunpack.c.l.b16 %v402
        %v847 = vunpack.c.l.b16 %v403
        %v848 = vunpack.c.l.b16 %v404
        %v849 = vunpack.c.l.b16 %v405
        %v850 = vunpack.c.l.b16 %v406
        %v851 = vunpack.c.l.b16 %v407
        %v852 = vunpack.c.l.b16 %v408
        %v853 = vunpack.c.l.b16 %v409
        %v854 = vunpack.c.l.b16 %v410
        %v855 = vunpack.c.l.b16 %v411
        %v856 = vunpack.c.l.b16 %v412
        %v857 = vunpack.c.l.b16 %v413
        %v858 = vunpack.c.l.b16 %v414
        %v859 = vunpack.c.l.b16 %v415
        %v860 = vunpack.c.l.b16 %v416
        %v861 = vunpack.c.l.b16 %v417
        %v862 = vunpack.c.l.b16 %v418
        %v863 = vunpack.c.l.b16 %v419
        %v864 = vunpack.c.l.b16 %v420
        %v865 = vunpack.c.l.b16 %v421
        %v866 = vunpack.c.l.b16 %v422
        %v867 = vunpack.c.l.b16 %v423
        %v868 = vunpack.c.l.b16 %v424
        %v869 = vunpack.c.l.b16 %v425
        %v870 = vunpack.c.l.b16 %v426
        %v871 = vunpack.c.l.b16 %v427
        %v872 = vunpack.c.l.b16 %v428
        %v873 = vunpack.c.l.b16 %v429
        %v874 = vunpack.c.l.b16 %v430
        %v875 = vunpack.c.l.b16 %v431
        %v876 = vunpack.c.l.b16 %v432
        %v877 = vunpack.c.l.b16 %v433
        %v878 = vunpack.c.l.b16 %v434
        %v879 = vunpack.c.l.b16 %v435
        %v880 = vunpack.c.l.b16 %v436
        %v881 = vunpack.c.l.b16 %v437
        %v882 = vunpack.c.l.b16 %v438
        %v883 = vunpack.c.l.b16 %v439
        %v884 = vunpack.c.l.b16 %v440
        %v885 = vunpack.c.l.b16 %v441
        %v886 = vunpack.c.l.b16 %v442
        %v887 = vunpack.c.l.b16 %v443
        %v888 = vunpack.c.l.b16 %v444
        %v889 = vunpack.c.l.b16 %v445
        %v890 = vunpack.c.l.b16 %v446
        %v891 = vunpack.c.l.b16 %v447
        %v892 = vunpack.c.l.b16 %v448
        %v893 = vunpack.c.l.b16 %v449
        %v894 = vunpack.c.l.b16 %v450
        %v895 = vunpack.c.l.b16 %v451
        %v896 = vunpack.c.l.b16 %v452
        %v897 = vunpack.c.l.b16 %v453
        %v898 = vunpack.c.l.b16 %v454
        %v899 = vunpack.c.l.b16 %v455
        %v900 = vunpack.c.l.b16 %v456
        %v901 = vunpack.c.l.b16 %v457
        %v902 = vunpack.c.l.b16 %v458
        %v903 = vunpack.c.l.b16 %v459
        %v904 = vunpack.c.l.b16 %v460
        %v905 = vunpack.c.l.b16 %v461
        %v906 = vunpack.c.l.b16 %v462
        %v907 = vunpack.c.l.b16 %v463
        %v908 = vunpack.c.l.b16 %v464
        %v909 = vunpack.c.l.b16 %v465
        %v910 = vunpack.c.l.b16 %v466
        %v911 = vunpack.c.l.b16 %v467
        %v912 = vunpack.c.l.b16 %v468
        %v913 = vunpack.c.l.b16 %v469
        %v914 = vunpack.c.l.b16 %v470
        %v915 = vunpack.c.l.b16 %v471
        %v916 = vunpack.c.l.b16 %v472
        %v917 = vunpack.c.l.b16 %v473
        %v918 = vunpack.c.l.b16 %v474
        %v919 = vunpack.c.l.b16 %v475
        %v920 = vunpack.c.l.b16 %v476
        %v921 = vunpack.c.l.b16 %v477
        %v922 = vunpack.c.l.b16 %v478
        %v923 = vunpack.c.l.b16 %v479
        %v924 = vunpack.c.l.b16 %v480
        %v925 = vunpack.c.l.b16 %v481
        %v926 = vunpack.c.l.b16 %v482
        %v927 = vunpack.c.l.b16 %v483
        %v928 = vunpack.c.l.b16 %v484
        %v929 = vunpack.c.l.b16 %v485
        %v930 = vunpack.c.l.b16 %v486
        %v931 = vunpack.c.l.b16 %v487
        %v932 = vunpack.c.l.b16 %v488
        %v933 = vunpack.c.l.b16 %v489
        %v934 = vpack.c.b16 %v743, %v742
        %v935 = vpack.c.b16 %v745, %v744
        %v936 = vpack.c.b16 %v747, %v746
        %v937 = vpack.c.b16 %v749, %v748
        %v938 = vpack.c.b16 %v751, %v750
        %v939 = vpack.c.b16 %v753, %v752
        %v940 = vpack.c.b16 %v755, %v754
        %v941 = vpack.c.b16 %v757, %v756
        %v942 = vpack.c.b16 %v759, %v758
        %v943 = vpack.c.b16 %v761, %v760
        %v944 = vpack.c.b16 %v763, %v762
        %v945 = vpack.c.b16 %v765, %v764
        %v946 = vpack.c.b16 %v767, %v766
        %v947 = vpack.c.b16 %v769, %v768
        %v948 = vpack.c.b16 %v771, %v770
        %v949 = vpack.c.b16 %v773, %v772
        %v950 = vpack.c.b16 %v775, %v774
        %v951 = vpack.c.b16 %v777, %v776
        %v952 = vpack.c.b16 %v779, %v778
        %v953 = vpack.c.b16 %v781, %v780
        %v954 = vpack.c.b16 %v783, %v782
        %v955 = vpack.c.b16 %v785, %v784
        %v956 = vpack.c.b16 %v787, %v786
        %v957 = vpack.c.b16 %v789, %v788
        %v958 = vpack.c.b16 %v791, %v790
        %v959 = vpack.c.b16 %v793, %v792
        %v960 = vpack.c.b16 %v795, %v794
        %v961 = vpack.c.b16 %v797, %v796
        %v962 = vpack.c.b16 %v799, %v798
        %v963 = vpack.c.b16 %v801, %v800
        %v964 = vpack.c.b16 %v803, %v802
        %v965 = vpack.c.b16 %v805, %v804
        %v966 = vpack.c.b16 %v807, %v806
        %v967 = vpack.c.b16 %v809, %v808
        %v968 = vpack.c.b16 %v811, %v810
        %v969 = vpack.c.b16 %v813, %v812
        %v970 = vpack.c.b16 %v815, %v814
        %v971 = vpack.c.b16 %v817, %v816
        %v972 = vpack.c.b16 %v819, %v818
        %v973 = vpack.c.b16 %v821, %v820
        %v974 = vpack.c.b16 %v823, %v822
        %v975 = vpack.c.b16 %v825, %v824
        %v976 = vpack.c.b16 %v827, %v826
        %v977 = vpack.c.b16 %v829, %v828
        %v978 = vpack.c.b16 %v831, %v830
        %v979 = vpack.c.b16 %v833, %v832
        %v980 = vpack.c.b16 %v835, %v834
        %v981 = vpack.c.b16 %v837, %v836
        %v982 = vpack.c.b16 %v839, %v838
        %v983 = vpack.c.b16 %v841, %v840
        %v984 = vpack.c.b16 %v843, %v842
        %v985 = vpack.c.b16 %v845, %v844
        %v986 = vpack.c.b16 %v847, %v846
        %v987 = vpack.c.b16 %v849, %v848
        %v988 = vpack.c.b16 %v851, %v850
        %v989 = vpack.c.b16 %v853, %v852
        %v990 = vpack.c.b16 %v855, %v854
        %v991 = vpack.c.b16 %v857, %v856
        %v992 = vpack.c.b16 %v859, %v858
        %v993 = vpack.c.b16 %v861, %v860
        %v994 = vpack.c.b16 %v863, %v862
        %v995 = vpack.c.b16 %v865, %v864
        %v996 = vpack.c.b16 %v867, %v866
        %v997 = vpack.c.b16 %v869, %v868
        %v998 = vpack.c.b16 %v871, %v870
        %v999 = vpack.c.b16 %v873, %v872
        %v1000 = vpack.c.b16 %v875, %v874
        %v1001 = vpack.c.b16 %v877, %v876
        %v1002 = vpack.c.b16 %v879, %v878
        %v1003 = vpack.c.b16 %v881, %v880
        %v1004 = vpack.c.b16 %v883, %v882
        %v1005 = vpack.c.b16 %v885, %v884
        %v1006 = vpack.c.b16 %v887, %v886
        %v1007 = vpack.c.b16 %v889, %v888
        %v1008 = vpack.c.b16 %v891, %v890
        %v1009 = vpack.c.b16 %v893, %v892
        %v1010 = vpack.c.b16 %v895, %v894
        %v1011 = vpack.c.b16 %v897, %v896
        %v1012 = vpack.c.b16 %v899, %v898
        %v1013 = vpack.c.b16 %v901, %v900
        %v1014 = vpack.c.b16 %v903, %v902
        %v1015 = vpack.c.b16 %v905, %v904
        %v1016 = vpack.c.b16 %v907, %v906
        %v1017 = vpack.c.b16 %v909, %v908
        %v1018 = vpack.c.b16 %v911, %v910
        %v1019 = vpack.c.b16 %v913, %v912
        %v1020 = vpack.c.b16 %v915, %v914
        %v1021 = vpack.c.b16 %v917, %v916
        %v1022 = vpack.c.b16 %v919, %v918
        %v1023 = vpack.c.b16 %v921, %v920
        %v1024 = vpack.c.b16 %v923, %v922
        %v1025 = vpack.c.b16 %v925, %v924
        %v1026 = vpack.c.b16 %v927, %v926
        %v1027 = vpack.c.b16 %v929, %v928
        %v1028 = vpack.c.b16 %v931, %v930
        %v1029 = vpack.c.b16 %v933, %v932
        %1126 = vmatprep.subr.bf16.mxu0 0
        %1127 = vmatpush1.bf16.msra.mxu0 %v934
        %1128 = vmatprep.subr.bf16.mxu0 0
        %1129 = vmatpush1.bf16.msra.mxu0 %v935
        %1130 = vmatprep.subr.bf16.mxu0 0
        %1131 = vmatpush1.bf16.msra.mxu0 %v936
        %1132 = vmatprep.subr.bf16.mxu0 0
        %1133 = vmatpush1.bf16.msra.mxu0 %v937
        %1134 = vmatprep.subr.bf16.mxu0 0
        %1135 = vmatpush1.bf16.msra.mxu0 %v938
        %1136 = vmatprep.subr.bf16.mxu0 0
        %1137 = vmatpush1.bf16.msra.mxu0 %v939
        %1138 = vmatprep.subr.bf16.mxu0 0
        %1139 = vmatpush1.bf16.msra.mxu0 %v940
        %1140 = vmatprep.subr.bf16.mxu0 0
        %1141 = vmatpush1.bf16.msra.mxu0 %v941
        %1142 = vmatprep.subr.bf16.mxu0 0
        %1143 = vmatpush1.bf16.msra.mxu0 %v942
        %1144 = vmatprep.subr.bf16.mxu0 0
        %1145 = vmatpush1.bf16.msra.mxu0 %v943
        %1146 = vmatprep.subr.bf16.mxu0 0
        %1147 = vmatpush1.bf16.msra.mxu0 %v944
        %1148 = vmatprep.subr.bf16.mxu0 0
        %1149 = vmatpush1.bf16.msra.mxu0 %v945
        %1150 = vmatprep.subr.bf16.mxu0 0
        %1151 = vmatpush1.bf16.msra.mxu0 %v946
        %1152 = vmatprep.subr.bf16.mxu0 0
        %1153 = vmatpush1.bf16.msra.mxu0 %v947
        %1154 = vmatprep.subr.bf16.mxu0 0
        %1155 = vmatpush1.bf16.msra.mxu0 %v948
        %1156 = vmatprep.subr.bf16.mxu0 0
        %1157 = vmatpush1.bf16.msra.mxu0 %v949
        %1158 = vmatprep.mubr.bf16.mxu0 %v527
        %1159 = vmatmul.mubr.bf16.gmra.mrb[0].mxu0 %v526
        %v1160 = vpop.f32.mrb[0].mxu0
        %v1161 = vadd.f32 0.0, %v1160
        %v1162 = vpop.f32.mrb[0].mxu0
        %v1163 = vpop.f32.mrb[0].mxu0
        %v1164 = vadd.f32 0.0, %v1163
        %v1165 = vpop.f32.mrb[0].mxu0
        %1166 = vdwg.mxu0
        %1167 = vmatprep.subr.bf16.mxu0 0
        %1168 = vmatpush1.bf16.msra.mxu0 %v950
        %1169 = vmatprep.subr.bf16.mxu0 0
        %1170 = vmatpush1.bf16.msra.mxu0 %v951
        %1171 = vmatprep.subr.bf16.mxu0 0
        %1172 = vmatpush1.bf16.msra.mxu0 %v952
        %1173 = vmatprep.subr.bf16.mxu0 0
        %1174 = vmatpush1.bf16.msra.mxu0 %v953
        %1175 = vmatprep.subr.bf16.mxu0 0
        %1176 = vmatpush1.bf16.msra.mxu0 %v954
        %1177 = vmatprep.subr.bf16.mxu0 0
        %1178 = vmatpush1.bf16.msra.mxu0 %v955
        %1179 = vmatprep.subr.bf16.mxu0 0
        %1180 = vmatpush1.bf16.msra.mxu0 %v956
        %1181 = vmatprep.subr.bf16.mxu0 0
        %1182 = vmatpush1.bf16.msra.mxu0 %v957
        %1183 = vmatprep.subr.bf16.mxu0 0
        %1184 = vmatpush1.bf16.msra.mxu0 %v958
        %1185 = vmatprep.subr.bf16.mxu0 0
        %1186 = vmatpush1.bf16.msra.mxu0 %v959
        %1187 = vmatprep.subr.bf16.mxu0 0
        %1188 = vmatpush1.bf16.msra.mxu0 %v960
        %1189 = vmatprep.subr.bf16.mxu0 0
        %1190 = vmatpush1.bf16.msra.mxu0 %v961
        %1191 = vmatprep.subr.bf16.mxu0 0
        %1192 = vmatpush1.bf16.msra.mxu0 %v962
        %1193 = vmatprep.subr.bf16.mxu0 0
        %1194 = vmatpush1.bf16.msra.mxu0 %v963
        %1195 = vmatprep.subr.bf16.mxu0 0
        %1196 = vmatpush1.bf16.msra.mxu0 %v964
        %1197 = vmatprep.subr.bf16.mxu0 0
        %1198 = vmatpush1.bf16.msra.mxu0 %v965
        %1199 = vmatprep.mubr.bf16.mxu0 %v529
        %1200 = vmatmul.mubr.bf16.gmra.mrb[0].mxu0 %v528
        %v1201 = vpop.f32.mrb[0].mxu0
        %v1202 = vadd.f32 %v1161, %v1201
        %v1203 = vpop.f32.mrb[0].mxu0
        %v1204 = vpop.f32.mrb[0].mxu0
        %v1205 = vadd.f32 %v1164, %v1204
        %v1206 = vpop.f32.mrb[0].mxu0
        %1207 = vdwg.mxu0
        %1208 = vmatprep.subr.bf16.mxu0 0
        %1209 = vmatpush1.bf16.msra.mxu0 %v966
        %1210 = vmatprep.subr.bf16.mxu0 0
        %1211 = vmatpush1.bf16.msra.mxu0 %v967
        %1212 = vmatprep.subr.bf16.mxu0 0
        %1213 = vmatpush1.bf16.msra.mxu0 %v968
        %1214 = vmatprep.subr.bf16.mxu0 0
        %1215 = vmatpush1.bf16.msra.mxu0 %v969
        %1216 = vmatprep.subr.bf16.mxu0 0
        %1217 = vmatpush1.bf16.msra.mxu0 %v970
        %1218 = vmatprep.subr.bf16.mxu0 0
        %1219 = vmatpush1.bf16.msra.mxu0 %v971
        %1220 = vmatprep.subr.bf16.mxu0 0
        %1221 = vmatpush1.bf16.msra.mxu0 %v972
        %1222 = vmatprep.subr.bf16.mxu0 0
        %1223 = vmatpush1.bf16.msra.mxu0 %v973
        %1224 = vmatprep.subr.bf16.mxu0 0
        %1225 = vmatpush1.bf16.msra.mxu0 %v974
        %1226 = vmatprep.subr.bf16.mxu0 0
        %1227 = vmatpush1.bf16.msra.mxu0 %v975
        %1228 = vmatprep.subr.bf16.mxu0 0
        %1229 = vmatpush1.bf16.msra.mxu0 %v976
        %1230 = vmatprep.subr.bf16.mxu0 0
        %1231 = vmatpush1.bf16.msra.mxu0 %v977
        %1232 = vmatprep.subr.bf16.mxu0 0
        %1233 = vmatpush1.bf16.msra.mxu0 %v978
        %1234 = vmatprep.subr.bf16.mxu0 0
        %1235 = vmatpush1.bf16.msra.mxu0 %v979
        %1236 = vmatprep.subr.bf16.mxu0 0
        %1237 = vmatpush1.bf16.msra.mxu0 %v980
        %1238 = vmatprep.subr.bf16.mxu0 0
        %1239 = vmatpush1.bf16.msra.mxu0 %v981
        %1240 = vmatprep.mubr.bf16.mxu0 %v531
        %1241 = vmatmul.mubr.bf16.gmra.mrb[0].mxu0 %v530
        %v1242 = vpop.f32.mrb[0].mxu0
        %v1243 = vadd.f32 %v1202, %v1242
        %v1244 = vpop.f32.mrb[0].mxu0
        %v1245 = vpop.f32.mrb[0].mxu0
        %v1246 = vadd.f32 %v1205, %v1245
        %v1247 = vpop.f32.mrb[0].mxu0
        %1248 = vdwg.mxu0
        %1249 = vmatprep.subr.bf16.mxu0 0
        %1250 = vmatpush1.bf16.msra.mxu0 %v982
        %1251 = vmatprep.subr.bf16.mxu0 0
        %1252 = vmatpush1.bf16.msra.mxu0 %v983
        %1253 = vmatprep.subr.bf16.mxu0 0
        %1254 = vmatpush1.bf16.msra.mxu0 %v984
        %1255 = vmatprep.subr.bf16.mxu0 0
        %1256 = vmatpush1.bf16.msra.mxu0 %v985
        %1257 = vmatprep.subr.bf16.mxu0 0
        %1258 = vmatpush1.bf16.msra.mxu0 %v986
        %1259 = vmatprep.subr.bf16.mxu0 0
        %1260 = vmatpush1.bf16.msra.mxu0 %v987
        %1261 = vmatprep.subr.bf16.mxu0 0
        %1262 = vmatpush1.bf16.msra.mxu0 %v988
        %1263 = vmatprep.subr.bf16.mxu0 0
        %1264 = vmatpush1.bf16.msra.mxu0 %v989
        %1265 = vmatprep.subr.bf16.mxu0 0
        %1266 = vmatpush1.bf16.msra.mxu0 %v990
        %1267 = vmatprep.subr.bf16.mxu0 0
        %1268 = vmatpush1.bf16.msra.mxu0 %v991
        %1269 = vmatprep.subr.bf16.mxu0 0
        %1270 = vmatpush1.bf16.msra.mxu0 %v992
        %1271 = vmatprep.subr.bf16.mxu0 0
        %1272 = vmatpush1.bf16.msra.mxu0 %v993
        %1273 = vmatprep.subr.bf16.mxu0 0
        %1274 = vmatpush1.bf16.msra.mxu0 %v994
        %1275 = vmatprep.subr.bf16.mxu0 0
        %1276 = vmatpush1.bf16.msra.mxu0 %v995
        %1277 = vmatprep.subr.bf16.mxu0 0
        %1278 = vmatpush1.bf16.msra.mxu0 %v996
        %1279 = vmatprep.subr.bf16.mxu0 0
        %1280 = vmatpush1.bf16.msra.mxu0 %v997
        %1281 = vmatprep.mubr.bf16.mxu0 %v533
        %1282 = vmatmul.mubr.bf16.gmra.mrb[0].mxu0 %v532
        %v1283 = vpop.f32.mrb[0].mxu0
        %v1284 = vadd.f32 %v1243, %v1283
        %v1285 = vpop.f32.mrb[0].mxu0
        %v1286 = vpop.f32.mrb[0].mxu0
        %v1287 = vadd.f32 %v1246, %v1286
        %v1288 = vpop.f32.mrb[0].mxu0
        %1289 = vdwg.mxu0
        %1290 = vmatprep.subr.bf16.mxu0 0
        %1291 = vmatpush1.bf16.msra.mxu0 %v998
        %1292 = vmatprep.subr.bf16.mxu0 0
        %1293 = vmatpush1.bf16.msra.mxu0 %v999
        %1294 = vmatprep.subr.bf16.mxu0 0
        %1295 = vmatpush1.bf16.msra.mxu0 %v1000
        %1296 = vmatprep.subr.bf16.mxu0 0
        %1297 = vmatpush1.bf16.msra.mxu0 %v1001
        %1298 = vmatprep.subr.bf16.mxu0 0
        %1299 = vmatpush1.bf16.msra.mxu0 %v1002
        %1300 = vmatprep.subr.bf16.mxu0 0
        %1301 = vmatpush1.bf16.msra.mxu0 %v1003
        %1302 = vmatprep.subr.bf16.mxu0 0
        %1303 = vmatpush1.bf16.msra.mxu0 %v1004
        %1304 = vmatprep.subr.bf16.mxu0 0
        %1305 = vmatpush1.bf16.msra.mxu0 %v1005
        %1306 = vmatprep.subr.bf16.mxu0 0
        %1307 = vmatpush1.bf16.msra.mxu0 %v1006
        %1308 = vmatprep.subr.bf16.mxu0 0
        %1309 = vmatpush1.bf16.msra.mxu0 %v1007
        %1310 = vmatprep.subr.bf16.mxu0 0
        %1311 = vmatpush1.bf16.msra.mxu0 %v1008
        %1312 = vmatprep.subr.bf16.mxu0 0
        %1313 = vmatpush1.bf16.msra.mxu0 %v1009
        %1314 = vmatprep.subr.bf16.mxu0 0
        %1315 = vmatpush1.bf16.msra.mxu0 %v1010
        %1316 = vmatprep.subr.bf16.mxu0 0
        %1317 = vmatpush1.bf16.msra.mxu0 %v1011
        %1318 = vmatprep.subr.bf16.mxu0 0
        %1319 = vmatpush1.bf16.msra.mxu0 %v1012
        %1320 = vmatprep.subr.bf16.mxu0 0
        %1321 = vmatpush1.bf16.msra.mxu0 %v1013
        %1322 = vmatprep.mubr.bf16.mxu0 %v535
        %1323 = vmatmul.mubr.bf16.gmra.mrb[0].mxu0 %v534
        %v1324 = vpop.f32.mrb[0].mxu0
        %v1325 = vadd.f32 %v1284, %v1324
        %v1326 = vpop.f32.mrb[0].mxu0
        %v1327 = vpop.f32.mrb[0].mxu0
        %v1328 = vadd.f32 %v1287, %v1327
        %v1329 = vpop.f32.mrb[0].mxu0
        %1330 = vdwg.mxu0
        %1331 = vmatprep.subr.bf16.mxu0 0
        %1332 = vmatpush1.bf16.msra.mxu0 %v1014
        %1333 = vmatprep.subr.bf16.mxu0 0
        %1334 = vmatpush1.bf16.msra.mxu0 %v1015
        %1335 = vmatprep.subr.bf16.mxu0 0
        %1336 = vmatpush1.bf16.msra.mxu0 %v1016
        %1337 = vmatprep.subr.bf16.mxu0 0
        %1338 = vmatpush1.bf16.msra.mxu0 %v1017
        %1339 = vmatprep.subr.bf16.mxu0 0
        %1340 = vmatpush1.bf16.msra.mxu0 %v1018
        %1341 = vmatprep.subr.bf16.mxu0 0
        %1342 = vmatpush1.bf16.msra.mxu0 %v1019
        %1343 = vmatprep.subr.bf16.mxu0 0
        %1344 = vmatpush1.bf16.msra.mxu0 %v1020
        %1345 = vmatprep.subr.bf16.mxu0 0
        %1346 = vmatpush1.bf16.msra.mxu0 %v1021
        %1347 = vmatprep.subr.bf16.mxu0 0
        %1348 = vmatpush1.bf16.msra.mxu0 %v1022
        %1349 = vmatprep.subr.bf16.mxu0 0
        %1350 = vmatpush1.bf16.msra.mxu0 %v1023
        %1351 = vmatprep.subr.bf16.mxu0 0
        %1352 = vmatpush1.bf16.msra.mxu0 %v1024
        %1353 = vmatprep.subr.bf16.mxu0 0
        %1354 = vmatpush1.bf16.msra.mxu0 %v1025
        %1355 = vmatprep.subr.bf16.mxu0 0
        %1356 = vmatpush1.bf16.msra.mxu0 %v1026
        %1357 = vmatprep.subr.bf16.mxu0 0
        %1358 = vmatpush1.bf16.msra.mxu0 %v1027
        %1359 = vmatprep.subr.bf16.mxu0 0
        %1360 = vmatpush1.bf16.msra.mxu0 %v1028
        %1361 = vmatprep.subr.bf16.mxu0 0
        %1362 = vmatpush1.bf16.msra.mxu0 %v1029
        %1363 = vmatprep.mubr.bf16.mxu0 %v537
        %1364 = vmatmul.mubr.bf16.gmra.mrb[0].mxu0 %v536
        %v1365 = vpop.f32.mrb[0].mxu0
        %v1366 = vadd.f32 %v1325, %v1365
        %v1367 = vpop.f32.mrb[0].mxu0
        %v1368 = vpop.f32.mrb[0].mxu0
        %v1369 = vadd.f32 %v1328, %v1368
        %v1370 = vpop.f32.mrb[0].mxu0
        %1371 = vdwg.mxu0
        %p1372 = scmp.eq.s32.totalorder %s28, 0
        // Predicated region
        $region49: #{tpu_custom_call.1} parent=35 // pred_check
          %p1373 = pneg %p1372
        $region50: #{tpu_custom_call.1} parent=35 // pred_check_branch
          %1375 = sbr.rel (%p1373) target = $region52
        $region51: #{tpu_custom_call.1} parent=35 // pred_region
          %1376 = vst [vmem:[#allocation2] sm:$0xff] %v1366
          %1377 = vst [vmem:[#allocation2 + $0x8] sm:$0xff] %v1369
        $region52: #{tpu_custom_call.1} parent=35 // pred_fallthru
          _
        %p1378 = scmp.ne.s32.totalorder %s28, 0
        // Predicated region
        $region53: #{tpu_custom_call.1} parent=35 // pred_check
          %p1379 = pneg %p1378
        $region54: #{tpu_custom_call.1} parent=35 // pred_check_branch
          %1381 = sbr.rel (%p1379) target = $region56
        $region55: #{tpu_custom_call.1} parent=35 // pred_region
          %v1382 = vld [vmem:[#allocation2] sm:$0xff]
          %v1383 = vld [vmem:[#allocation2 + $0x8] sm:$0xff]
          %v1384 = vadd.f32 %v1382, %v1366
          %v1385 = vadd.f32 %v1383, %v1369
          %1386 = vst [vmem:[#allocation2] sm:$0xff] %v1384
          %1387 = vst [vmem:[#allocation2 + $0x8] sm:$0xff] %v1385
        $region56: #{tpu_custom_call.1} parent=35 // pred_fallthru
          _
        %p1388 = scmp.eq.s32.totalorder %s28, 1
        // Predicated region
        $region57: #{tpu_custom_call.1} parent=35 // pred_check
          %p1389 = pneg %p1388
        $region58: #{tpu_custom_call.1} parent=35 // pred_check_branch
          %1391 = sbr.rel (%p1389) target = $region60
        $region59: #{tpu_custom_call.1} parent=35 // pred_region
          %v1392 = vld [vmem:[#allocation2] sm:$0xff]
          %v1393 = vld [vmem:[#allocation2 + $0x8] sm:$0xff]
          %v1394 = vmul.f32 %v1392, %v1392
          %v1395 = vmul.f32 %v1393, %v1393
          %1396 = vadd.xlane.f32.xlu0 %v1394
          %v1397 = vpop.xlane.xlu0 %1396
          %1398 = vadd.xlane.f32.xlu0 %v1395
          %v1399 = vpop.xlane.xlu0 %1398
          %v1400 = vmax.f32 %v1397, 1e-12
          %v1401 = vmax.f32 %v1399, 1e-12
          %v1402 = vrsqrt.pop %v1400
          %v1403 = vrsqrt.pop %v1401
          %s1404 = sld [smem:[#allocation3]]
          %v1405 = vstv %s1404
          %v1406 = vmul.f32 %v1402, %v1405
          %v1407 = vmul.f32 %v1403, %v1405
          %v1408 = vmul.f32 %v1392, %v1406
          %v1409 = vmul.f32 %v1393, %v1407
          %v1410 = vpack.c.bf16 %v1409, %v1408
          %v1411 = vld [vmem:[#allocation9] sm:$0xf]
          %v1412 = vld [vmem:[#allocation9 + $0x4] sm:$0xf]
          %v1413 = vld [vmem:[#allocation9 + $0x8] sm:$0xf]
          %v1414 = vld [vmem:[#allocation9 + $0xc] sm:$0xf]
          %v1415 = vld [vmem:[#allocation9 + $0x10] sm:$0xf]
          %v1416 = vld [vmem:[#allocation9 + $0x14] sm:$0xf]
          %v1417 = vld [vmem:[#allocation9 + $0x18] sm:$0xf]
          %v1418 = vld [vmem:[#allocation9 + $0x1c] sm:$0xf]
          %v1419 = vld [vmem:[#allocation9 + $0x20] sm:$0xf]
          %v1420 = vld [vmem:[#allocation9 + $0x24] sm:$0xf]
          %v1421 = vld [vmem:[#allocation9 + $0x28] sm:$0xf]
          %v1422 = vld [vmem:[#allocation9 + $0x2c] sm:$0xf]
          %v1423 = vld [vmem:[#allocation9 + $0x30] sm:$0xf]
          %v1424 = vld [vmem:[#allocation9 + $0x34] sm:$0xf]
          %v1425 = vld [vmem:[#allocation9 + $0x38] sm:$0xf]
          %v1426 = vld [vmem:[#allocation9 + $0x3c] sm:$0xf]
          %v1443 = vunpack.c.l.b16 %v1411
          %v1444 = vunpack.c.l.b16 %v1412
          %v1445 = vunpack.c.l.b16 %v1413
          %v1446 = vunpack.c.l.b16 %v1414
          %v1447 = vunpack.c.l.b16 %v1415
          %v1448 = vunpack.c.l.b16 %v1416
          %v1449 = vunpack.c.l.b16 %v1417
          %v1450 = vunpack.c.l.b16 %v1418
          %v1451 = vunpack.c.l.b16 %v1419
          %v1452 = vunpack.c.l.b16 %v1420
          %v1453 = vunpack.c.l.b16 %v1421
          %v1454 = vunpack.c.l.b16 %v1422
          %v1455 = vunpack.c.l.b16 %v1423
          %v1456 = vunpack.c.l.b16 %v1424
          %v1457 = vunpack.c.l.b16 %v1425
          %v1458 = vunpack.c.l.b16 %v1426
          %v1459 = vpack.c.b16 %v1444, %v1443
          %v1460 = vpack.c.b16 %v1446, %v1445
          %v1461 = vpack.c.b16 %v1448, %v1447
          %v1462 = vpack.c.b16 %v1450, %v1449
          %v1463 = vpack.c.b16 %v1452, %v1451
          %v1464 = vpack.c.b16 %v1454, %v1453
          %v1465 = vpack.c.b16 %v1456, %v1455
          %v1466 = vpack.c.b16 %v1458, %v1457
          %1475 = vmatprep.subr.bf16.mxu0 0
          %1476 = vmatpush1.bf16.msra.mxu0 %v1459
          %1477 = vmatprep.subr.bf16.mxu0 0
          %1478 = vmatpush1.bf16.msra.mxu0 %v1460
          %1479 = vmatprep.subr.bf16.mxu0 0
          %1480 = vmatpush1.bf16.msra.mxu0 %v1461
          %1481 = vmatprep.subr.bf16.mxu0 0
          %1482 = vmatpush1.bf16.msra.mxu0 %v1462
          %1483 = vmatprep.subr.bf16.mxu0 0
          %1484 = vmatpush1.bf16.msra.mxu0 %v1463
          %1485 = vmatprep.subr.bf16.mxu0 0
          %1486 = vmatpush1.bf16.msra.mxu0 %v1464
          %1487 = vmatprep.subr.bf16.mxu0 0
          %1488 = vmatpush1.bf16.msra.mxu0 %v1465
          %1489 = vmatprep.subr.bf16.mxu0 0
          %1490 = vmatpush1.bf16.msra.mxu0 %v1466
          %1491 = vmatprep.subr.bf16.mxu0 0
          %1492 = vmatpush1.bf16.msra.mxu0 0
          %1493 = vmatprep.subr.bf16.mxu0 0
          %1494 = vmatpush1.bf16.msra.mxu0 0
          %1495 = vmatprep.subr.bf16.mxu0 0
          %1496 = vmatpush1.bf16.msra.mxu0 0
          %1497 = vmatprep.subr.bf16.mxu0 0
          %1498 = vmatpush1.bf16.msra.mxu0 0
          %1499 = vmatprep.subr.bf16.mxu0 0
          %1500 = vmatpush1.bf16.msra.mxu0 0
          %1501 = vmatprep.subr.bf16.mxu0 0
          %1502 = vmatpush1.bf16.msra.mxu0 0
          %1503 = vmatprep.subr.bf16.mxu0 0
          %1504 = vmatpush1.bf16.msra.mxu0 0
          %1505 = vmatprep.subr.bf16.mxu0 0
          %1506 = vmatpush1.bf16.msra.mxu0 0
          %1507 = vmatprep.mubr.bf16.mxu0 0
          %1508 = vmatmul.mubr.bf16.gmra.mrb[0].mxu0 %v1410
          %v1509 = vpop.f32.mrb[0].mxu0
          %v1510 = vadd.f32 0.0, %v1509
          %v1511 = vpop.f32.mrb[0].mxu0
          %v1512 = vpop.f32.mrb[0].mxu0
          %v1513 = vadd.f32 0.0, %v1512
          %v1514 = vpop.f32.mrb[0].mxu0
          %1515 = vdwg.mxu0
          %v1516 = vsub.f32 1.0, %v1510
          %v1517 = vsub.f32 1.0, %v1513
          %1518 = vst [vmem:[#allocation10] sm:$0xff] %v1516
          %1519 = vst [vmem:[#allocation10 + $0x8] sm:$0xff] %v1517
        $region60: #{tpu_custom_call.1} parent=35 // pred_fallthru
          _
        // Predicated region
        $region61: #{tpu_custom_call.1} parent=35 // pred_check
          %p1520 = pneg %p149
        $region62: #{tpu_custom_call.1} parent=35 // pred_check_branch
          %1522 = sbr.rel (%p1520) target = $region64
        $region63: #{tpu_custom_call.1} parent=35 // pred_region
          %s1523 = smul.u32 2, %s27
          %s1525 = ssub.s32 256, 256
          %1526 = vsyncadd [#allocation6], %s1525
          %s1527 = smul.addr %s1523, 128
          %s1528 = scalar_lea.hbm %s4, %s1527
          %s1529 = sshll.u32 [#allocation10], 4
          %s1530 = int_to_ptr.vmem [resolvable:$true] %s1529
          %1535 = dma.vmem_to_hbm [thread:$0]  %s1530, 256, %s1528, [#allocation6], 128, 128, 8
        $region64: #{tpu_custom_call.1} parent=35 // pred_fallthru
          _
        // Predicated region
        $region65: #{tpu_custom_call.1} parent=35 // pred_check
          %p1536 = pneg %p149
        $region66: #{tpu_custom_call.1} parent=35 // pred_check_branch
          %1538 = sbr.rel (%p1536) target = $region68
        $region67: #{tpu_custom_call.1} parent=35 // pred_region
          %1539 = dma.done [#allocation6], 256
        $region68: #{tpu_custom_call.1} parent=35 // pred_fallthru
          _
      $region36: #{tpu_custom_call.1} parent=5 // pred_fallthru
        _
      %p1540 = scmp.le.s32.totalorder 2, %s18
      // Predicated region
      $region69: #{tpu_custom_call.1} parent=5 // pred_check
        %p1541 = pneg %p1540
      $region70: #{tpu_custom_call.1} parent=5 // pred_check_branch
        %1543 = sbr.rel (%p1541) target = $region72
      $region71: #{tpu_custom_call.1} parent=5 // pred_region
        %s1544 = ssub.s32 %s18, 2
      $region72: #{tpu_custom_call.1} parent=5 // pred_fallthru
        _
    $region6: #{tpu_custom_call.1} parent=1 // loop_footer
      %s22 = sadd.s32 1, %s18
    $region7: #{tpu_custom_call.1} parent=1 // loop_footer_branch
      %17 = sbr.rel target = $region3
    $region8: #{tpu_custom_call.1} parent=1 // loop_exit
      _
    %1545 = vsyncpa [#allocation5], 1
    %s1546 = scalar_lea.sflag [#allocation5], 1
    %1547 = vsyncpa %s1546, 1
    %1548 = vsyncpa [#allocation8], 1
    %s1549 = scalar_lea.sflag [#allocation8], 1
    %1550 = vsyncpa %s1549, 1
    %1551 = vsyncpa [#allocation6], 1
    %s1552 = scalar_lea.sflag [#allocation6], 1
    %1553 = vsyncpa %s1552, 1

</llo_original>
